<compile_context>
chip_gen: v7x
topology: tpu7x:2x2x1
jax: 0.10.0
libtpu: 0.0.40
codegen_flags: <defaults>
</compile_context>

<pallas_src>
import functools

import jax
import jax.numpy as jnp
from jax.experimental import pallas as pl
from jax.experimental.pallas import tpu as pltpu

OBS_DIM = 48     # single_observation_space["policy"] flattened size (synthetic)
ACT_DIM = 12     # single_action_space flattened size (synthetic)
H1, H2, H3 = 512, 256, 128
W4_PAD = 128     # last-layer weight padded to a full 128-lane MXU tile
EPS = 1e-8

TB_MAX = 2048                    # max batch-tile rows per grid step
VMEM_LIMIT = 48 * 1024 * 1024    # explicit scoped-VMEM budget (safe on all gens)


def _cdiv(a, b):
    return -(-a // b)


def _round_up(n, m):
    return ((n + m - 1) // m) * m


def _default_elu_dtype():
    """bf16 ELU on v6e/v7x+ (bf16 VPU/EUP); f32 on v5e and older chips."""
    try:
        kind = jax.devices()[0].device_kind.lower()
    except Exception:
        return jnp.float32
    for old in ("v2", "v3", "v4", "v5"):
        if old in kind:
            return jnp.float32
    return jnp.bfloat16


def agent_forward_kernel(x_ref, w1_ref, b1_ref, w2_ref, b2_ref,
                         w3_ref, b3_ref, w4_ref, b4_ref, out_ref, *, elu_dtype):
    # Obs normalization is folded into (w1, b1) by prepare_params(). Weights are
    # bf16 (native MXU); dots accumulate in f32; biases are f32.
    def layer(h_bf16, w_ref, b_ref):
        z = jnp.dot(h_bf16, w_ref[...],
                    preferred_element_type=jnp.float32) + b_ref[...]
        z = z.astype(elu_dtype)
        # ELU(alpha=1): where() is a select, so exp() overflow in the unselected
        # branch is discarded -- no clamp needed.
        a = jnp.where(z > 0.0, z, jnp.exp(z) - 1.0)
        return a.astype(jnp.bfloat16)

    h = layer(x_ref[...].astype(jnp.bfloat16), w1_ref, b1_ref)
    h = layer(h, w2_ref, b2_ref)
    h = layer(h, w3_ref, b3_ref)
    y = jnp.dot(h, w4_ref[...], preferred_element_type=jnp.float32) + b4_ref[...]
    # Narrow store: only the real ACT_DIM lanes go to HBM (masked vst), so the
    # wrapper needs no lane-slice kernel afterwards.
    out_ref[...] = y[:, :ACT_DIM]


def prepare_params(p):
    """One-time parameter prep, hoisted out of the per-call path.

    Folds RunningMeanStd (update=False -> constants) into layer 1, pads the last
    layer to a full 128-lane MXU tile, and casts weights to bf16.
    """
    inv_std = jax.lax.rsqrt(p["running_var"] + EPS)                  # [1, OBS]
    w1f = p["w1"] * inv_std.reshape(OBS_DIM, 1)                      # [OBS, H1]
    b1f = p["b1"] - (p["running_mean"] * inv_std) @ p["w1"]          # [1, H1]
    w4p = jnp.zeros((H3, W4_PAD), jnp.float32).at[:, :ACT_DIM].set(p["w4"])
    b4p = jnp.zeros((1, W4_PAD), jnp.float32).at[:, :ACT_DIM].set(p["b4"])
    return {
        "w1": w1f.astype(jnp.bfloat16), "b1": b1f.astype(jnp.float32),
        "w2": p["w2"].astype(jnp.bfloat16), "b2": p["b2"].astype(jnp.float32),
        "w3": p["w3"].astype(jnp.bfloat16), "b3": p["b3"].astype(jnp.float32),
        "w4": w4p.astype(jnp.bfloat16), "b4": b4p,
    }


@functools.partial(jax.jit, static_argnames=("tb_max", "elu_dtype"))
def agent_forward(x, prep, tb_max=TB_MAX, elu_dtype=None):
    """x: [B, OBS_DIM] float32 -> action_mean: [B, ACT_DIM] float32."""
    if elu_dtype is None:
        elu_dtype = _default_elu_dtype()
    B = x.shape[0]

    # Batch tiling: always an even grid of >= 2 tiles so the "parallel" axis can
    # shard over both v7x TensorCores; sublane dim (tb) kept a multiple of 8.
    num_tiles = max(2, _cdiv(B, tb_max))
    if num_tiles % 2:
        num_tiles += 1
    tb = _round_up(_cdiv(B, num_tiles), 8)
    b_pad = tb * num_tiles
    if b_pad != B:
        x = jnp.pad(x, ((0, b_pad - B), (0, 0)))

    def const_spec(shape):
        # Constant block index -> fetched once, VMEM-resident across grid steps.
        return pl.BlockSpec(shape, lambda i: (0, 0))

    out = pl.pallas_call(
        functools.partial(agent_forward_kernel, elu_dtype=elu_dtype),
        out_shape=jax.ShapeDtypeStruct((b_pad, ACT_DIM), jnp.float32),
        grid=(num_tiles,),
        in_specs=[
            pl.BlockSpec((tb, OBS_DIM), lambda i: (i, 0)),   # x tile (pipelined)
            const_spec((OBS_DIM, H1)), const_spec((1, H1)),
            const_spec((H1, H2)),      const_spec((1, H2)),
            const_spec((H2, H3)),      const_spec((1, H3)),
            const_spec((H3, W4_PAD)),  const_spec((1, W4_PAD)),
        ],
        out_specs=pl.BlockSpec((tb, ACT_DIM), lambda i: (i, 0)),
        compiler_params=pltpu.CompilerParams(
            dimension_semantics=("parallel",),
            vmem_limit_bytes=VMEM_LIMIT),
    )(x, prep["w1"], prep["b1"], prep["w2"], prep["b2"],
      prep["w3"], prep["b3"], prep["w4"], prep["b4"])

    return out[:B]


def init_params(key):
    """Deterministic synthetic parameters (shapes match the PyTorch module)."""
    ks = jax.random.split(key, 6)

    def linear(k, fan_in, fan_out, std):
        # Deterministic stand-in for orthogonal init (forward semantics don't
        # depend on the init scheme).
        w = jax.random.normal(k, (fan_in, fan_out), jnp.float32)
        w = w * (std / jnp.sqrt(jnp.float32(fan_in)))
        b = jnp.zeros((1, fan_out), jnp.float32)
        return w, b

    w1, b1 = linear(ks[0], OBS_DIM, H1, std=jnp.sqrt(2.0))
    w2, b2 = linear(ks[1], H1, H2, std=jnp.sqrt(2.0))
    w3, b3 = linear(ks[2], H2, H3, std=jnp.sqrt(2.0))
    w4, b4 = linear(ks[3], H3, ACT_DIM, std=0.01)

    # Non-trivial running stats so the normalization-folding path is exercised.
    running_mean = 0.3 * jax.random.normal(ks[4], (1, OBS_DIM), jnp.float32)
    running_var = jax.random.uniform(ks[5], (1, OBS_DIM), jnp.float32,
                                     minval=0.5, maxval=1.5)

    return {
        "running_mean": running_mean,   # obs_rms.running_mean
        "running_var": running_var,     # obs_rms.running_var
        "w1": w1, "b1": b1,
        "w2": w2, "b2": b2,
        "w3": w3, "b3": b3,
        "w4": w4, "b4": b4,
        # TODO(synk): actor_logstd / critic / rms update exist in the module but
        # are unused by forward(x, deterministic=True).
    }


def agent_forward_ref(x, p):
    # Pure-JAX f32 reference: the original (unfolded) PyTorch math.
    xn = (x - p["running_mean"]) / jnp.sqrt(p["running_var"] + EPS)
    elu = lambda z: jnp.where(z > 0.0, z, jnp.exp(z) - 1.0)
    h = elu(xn @ p["w1"] + p["b1"])
    h = elu(h @ p["w2"] + p["b2"])
    h = elu(h @ p["w3"] + p["b3"])
    return h @ p["w4"] + p["b4"]


def _check(out, ref):
    # bf16 matmuls vs an f32 reference: loose max-error bound plus a tight
    # mean-error bound (catches a structurally wrong kernel without flakiness).
    err = jnp.abs(out - ref)
    assert bool(jnp.isfinite(out).all())
    assert float(jnp.max(err)) < 2e-2, float(jnp.max(err))
    assert float(jnp.mean(err)) < 2e-3, float(jnp.mean(err))


if __name__ == "__main__":
    key = jax.random.PRNGKey(0)
    k_param, k_x1, k_x2 = jax.random.split(key, 3)
    params = init_params(k_param)
    prep = prepare_params(params)   # one-time parameter prep (hoisted)

    # Small case (grid of 2 tiny tiles).
    B = 8
    x = jax.random.normal(k_x1, (B, OBS_DIM), jnp.float32)
    out = jax.block_until_ready(agent_forward(x, prep))
    ref = agent_forward_ref(x, params)
    assert out.shape == (B, ACT_DIM)
    _check(out, ref)

    # Multi-tile case (grid > 2, ragged batch padded internally).
    B2 = 600
    x2 = jax.random.normal(k_x2, (B2, OBS_DIM), jnp.float32)
    out2 = jax.block_until_ready(agent_forward(x2, prep, tb_max=256))
    ref2 = agent_forward_ref(x2, params)
    assert out2.shape == (B2, ACT_DIM)
    _check(out2, ref2)

    print("KERNEL_OK")
</pallas_src>

<mosaic_0001>
module attributes {stable_mosaic.version = 11 : i64} {
  func.func @agent_forward_kernel(%arg0: i32, %arg1: memref<8x48xf32, #tpu.memory_space<vmem>>, %arg2: memref<48x512xbf16, #tpu.memory_space<vmem>>, %arg3: memref<1x512xf32, #tpu.memory_space<vmem>>, %arg4: memref<512x256xbf16, #tpu.memory_space<vmem>>, %arg5: memref<1x256xf32, #tpu.memory_space<vmem>>, %arg6: memref<256x128xbf16, #tpu.memory_space<vmem>>, %arg7: memref<1x128xf32, #tpu.memory_space<vmem>>, %arg8: memref<128x128xbf16, #tpu.memory_space<vmem>>, %arg9: memref<1x128xf32, #tpu.memory_space<vmem>>, %arg10: memref<8x12xf32, #tpu.memory_space<vmem>>) attributes {dimension_semantics = [#tpu.dimension_semantics<parallel>], iteration_bounds = array<i64: 2>, scalar_prefetch = 0 : i64, scratch_operands = 0 : i64, tpu.core_type = #tpu.core_type<tc>, window_params = [{transform_indices = @transform_0, window_bounds = array<i64: 8, 48>}, {pipeline_mode = #tpu.pipeline_mode<synchronous>, transform_indices = @transform_1, window_bounds = array<i64: 48, 512>}, {pipeline_mode = #tpu.pipeline_mode<synchronous>, transform_indices = @transform_2, window_bounds = array<i64: 1, 512>}, {pipeline_mode = #tpu.pipeline_mode<synchronous>, transform_indices = @transform_3, window_bounds = array<i64: 512, 256>}, {pipeline_mode = #tpu.pipeline_mode<synchronous>, transform_indices = @transform_4, window_bounds = array<i64: 1, 256>}, {pipeline_mode = #tpu.pipeline_mode<synchronous>, transform_indices = @transform_5, window_bounds = array<i64: 256, 128>}, {pipeline_mode = #tpu.pipeline_mode<synchronous>, transform_indices = @transform_6, window_bounds = array<i64: 1, 128>}, {pipeline_mode = #tpu.pipeline_mode<synchronous>, transform_indices = @transform_7, window_bounds = array<i64: 128, 128>}, {pipeline_mode = #tpu.pipeline_mode<synchronous>, transform_indices = @transform_8, window_bounds = array<i64: 1, 128>}, {transform_indices = @transform_9, window_bounds = array<i64: 8, 12>}]} {
    %c0 = arith.constant 0 : index
    %c0_0 = arith.constant 0 : index
    %0 = vector.load %arg1[%c0, %c0_0] : memref<8x48xf32, #tpu.memory_space<vmem>>, vector<8x48xf32>
    %1 = arith.truncf %0 : vector<8x48xf32> to vector<8x48xbf16>
    %c0_1 = arith.constant 0 : index
    %c0_2 = arith.constant 0 : index
    %2 = vector.load %arg2[%c0_1, %c0_2] : memref<48x512xbf16, #tpu.memory_space<vmem>>, vector<48x512xbf16>
    %cst = arith.constant dense<0.000000e+00> : vector<8x512xf32>
    %3 = tpu.matmul %1, %2, %cst {dimension_numbers = #tpu.dot_dimension_numbers<[1], [0], [0], [1], [0, 0, 1, 1], [], []>} : vector<8x48xbf16>, vector<48x512xbf16>, vector<8x512xf32> -> vector<8x512xf32>
    %c0_3 = arith.constant 0 : index
    %c0_4 = arith.constant 0 : index
    %4 = vector.load %arg3[%c0_3, %c0_4] : memref<1x512xf32, #tpu.memory_space<vmem>>, vector<1x512xf32>
    %5 = vector.broadcast %4 : vector<1x512xf32> to vector<8x512xf32>
    %6 = arith.addf %3, %5 : vector<8x512xf32>
    %7 = arith.truncf %6 : vector<8x512xf32> to vector<8x512xbf16>
    %cst_5 = arith.constant 0.000000e+00 : bf16
    %8 = vector.broadcast %cst_5 : bf16 to vector<8x512xbf16>
    %9 = arith.cmpf ogt, %7, %8 : vector<8x512xbf16>
    %10 = math.exp %7 : vector<8x512xbf16>
    %cst_6 = arith.constant 1.000000e+00 : bf16
    %11 = vector.broadcast %cst_6 : bf16 to vector<8x512xbf16>
    %12 = arith.subf %10, %11 : vector<8x512xbf16>
    %13 = arith.select %9, %7, %12 : vector<8x512xi1>, vector<8x512xbf16>
    %c0_7 = arith.constant 0 : index
    %c0_8 = arith.constant 0 : index
    %14 = vector.load %arg4[%c0_7, %c0_8] : memref<512x256xbf16, #tpu.memory_space<vmem>>, vector<512x256xbf16>
    %cst_9 = arith.constant dense<0.000000e+00> : vector<8x256xf32>
    %15 = tpu.matmul %13, %14, %cst_9 {dimension_numbers = #tpu.dot_dimension_numbers<[1], [0], [0], [1], [0, 0, 1, 1], [], []>} : vector<8x512xbf16>, vector<512x256xbf16>, vector<8x256xf32> -> vector<8x256xf32>
    %c0_10 = arith.constant 0 : index
    %c0_11 = arith.constant 0 : index
    %16 = vector.load %arg5[%c0_10, %c0_11] : memref<1x256xf32, #tpu.memory_space<vmem>>, vector<1x256xf32>
    %17 = vector.broadcast %16 : vector<1x256xf32> to vector<8x256xf32>
    %18 = arith.addf %15, %17 : vector<8x256xf32>
    %19 = arith.truncf %18 : vector<8x256xf32> to vector<8x256xbf16>
    %cst_12 = arith.constant 0.000000e+00 : bf16
    %20 = vector.broadcast %cst_12 : bf16 to vector<8x256xbf16>
    %21 = arith.cmpf ogt, %19, %20 : vector<8x256xbf16>
    %22 = math.exp %19 : vector<8x256xbf16>
    %cst_13 = arith.constant 1.000000e+00 : bf16
    %23 = vector.broadcast %cst_13 : bf16 to vector<8x256xbf16>
    %24 = arith.subf %22, %23 : vector<8x256xbf16>
    %25 = arith.select %21, %19, %24 : vector<8x256xi1>, vector<8x256xbf16>
    %c0_14 = arith.constant 0 : index
    %c0_15 = arith.constant 0 : index
    %26 = vector.load %arg6[%c0_14, %c0_15] : memref<256x128xbf16, #tpu.memory_space<vmem>>, vector<256x128xbf16>
    %cst_16 = arith.constant dense<0.000000e+00> : vector<8x128xf32>
    %27 = tpu.matmul %25, %26, %cst_16 {dimension_numbers = #tpu.dot_dimension_numbers<[1], [0], [0], [1], [0, 0, 1, 1], [], []>} : vector<8x256xbf16>, vector<256x128xbf16>, vector<8x128xf32> -> vector<8x128xf32>
    %c0_17 = arith.constant 0 : index
    %c0_18 = arith.constant 0 : index
    %28 = vector.load %arg7[%c0_17, %c0_18] : memref<1x128xf32, #tpu.memory_space<vmem>>, vector<1x128xf32>
    %29 = vector.broadcast %28 : vector<1x128xf32> to vector<8x128xf32>
    %30 = arith.addf %27, %29 : vector<8x128xf32>
    %31 = arith.truncf %30 : vector<8x128xf32> to vector<8x128xbf16>
    %cst_19 = arith.constant 0.000000e+00 : bf16
    %32 = vector.broadcast %cst_19 : bf16 to vector<8x128xbf16>
    %33 = arith.cmpf ogt, %31, %32 : vector<8x128xbf16>
    %34 = math.exp %31 : vector<8x128xbf16>
    %cst_20 = arith.constant 1.000000e+00 : bf16
    %35 = vector.broadcast %cst_20 : bf16 to vector<8x128xbf16>
    %36 = arith.subf %34, %35 : vector<8x128xbf16>
    %37 = arith.select %33, %31, %36 : vector<8x128xi1>, vector<8x128xbf16>
    %c0_21 = arith.constant 0 : index
    %c0_22 = arith.constant 0 : index
    %38 = vector.load %arg8[%c0_21, %c0_22] : memref<128x128xbf16, #tpu.memory_space<vmem>>, vector<128x128xbf16>
    %cst_23 = arith.constant dense<0.000000e+00> : vector<8x128xf32>
    %39 = tpu.matmul %37, %38, %cst_23 {dimension_numbers = #tpu.dot_dimension_numbers<[1], [0], [0], [1], [0, 0, 1, 1], [], []>} : vector<8x128xbf16>, vector<128x128xbf16>, vector<8x128xf32> -> vector<8x128xf32>
    %c0_24 = arith.constant 0 : index
    %c0_25 = arith.constant 0 : index
    %40 = vector.load %arg9[%c0_24, %c0_25] : memref<1x128xf32, #tpu.memory_space<vmem>>, vector<1x128xf32>
    %41 = vector.broadcast %40 : vector<1x128xf32> to vector<8x128xf32>
    %42 = arith.addf %39, %41 : vector<8x128xf32>
    %43 = vector.extract_strided_slice %42 {offsets = [0, 0], sizes = [8, 12], strides = [1, 1]} : vector<8x128xf32> to vector<8x12xf32>
    %c0_26 = arith.constant 0 : index
    %c0_27 = arith.constant 0 : index
    %44 = vector.load %arg10[%c0_26, %c0_27] : memref<8x12xf32, #tpu.memory_space<vmem>>, vector<8x12xf32>
    tpu.vector_store %arg10[%c0_26, %c0_27], %43 {strides = array<i32>} : memref<8x12xf32, #tpu.memory_space<vmem>>, vector<8x12xf32>,
    return
  }
  func.func @transform_0(%arg0: i32) -> (i32, i32) {
    %c0_i32 = arith.constant 0 : i32
    %c0_i32_0 = arith.constant 0 : i32
    return %arg0, %c0_i32 : i32, i32
  }
  func.func @transform_1(%arg0: i32) -> (i32, i32) {
    %c0_i32 = arith.constant 0 : i32
    %c0_i32_0 = arith.constant 0 : i32
    %c0_i32_1 = arith.constant 0 : i32
    return %c0_i32, %c0_i32_0 : i32, i32
  }
  func.func @transform_2(%arg0: i32) -> (i32, i32) {
    %c0_i32 = arith.constant 0 : i32
    %c0_i32_0 = arith.constant 0 : i32
    %c0_i32_1 = arith.constant 0 : i32
    return %c0_i32, %c0_i32_0 : i32, i32
  }
  func.func @transform_3(%arg0: i32) -> (i32, i32) {
    %c0_i32 = arith.constant 0 : i32
    %c0_i32_0 = arith.constant 0 : i32
    %c0_i32_1 = arith.constant 0 : i32
    return %c0_i32, %c0_i32_0 : i32, i32
  }
  func.func @transform_4(%arg0: i32) -> (i32, i32) {
    %c0_i32 = arith.constant 0 : i32
    %c0_i32_0 = arith.constant 0 : i32
    %c0_i32_1 = arith.constant 0 : i32
    return %c0_i32, %c0_i32_0 : i32, i32
  }
  func.func @transform_5(%arg0: i32) -> (i32, i32) {
    %c0_i32 = arith.constant 0 : i32
    %c0_i32_0 = arith.constant 0 : i32
    %c0_i32_1 = arith.constant 0 : i32
    return %c0_i32, %c0_i32_0 : i32, i32
  }
  func.func @transform_6(%arg0: i32) -> (i32, i32) {
    %c0_i32 = arith.constant 0 : i32
    %c0_i32_0 = arith.constant 0 : i32
    %c0_i32_1 = arith.constant 0 : i32
    return %c0_i32, %c0_i32_0 : i32, i32
  }
  func.func @transform_7(%arg0: i32) -> (i32, i32) {
    %c0_i32 = arith.constant 0 : i32
    %c0_i32_0 = arith.constant 0 : i32
    %c0_i32_1 = arith.constant 0 : i32
    return %c0_i32, %c0_i32_0 : i32, i32
  }
  func.func @transform_8(%arg0: i32) -> (i32, i32) {
    %c0_i32 = arith.constant 0 : i32
    %c0_i32_0 = arith.constant 0 : i32
    %c0_i32_1 = arith.constant 0 : i32
    return %c0_i32, %c0_i32_0 : i32, i32
  }
  func.func @transform_9(%arg0: i32) -> (i32, i32) {
    %c0_i32 = arith.constant 0 : i32
    %c0_i32_0 = arith.constant 0 : i32
    return %arg0, %c0_i32 : i32, i32
  }
}

</mosaic_0001>

<llo_original>
// kernel: agent_forward.1
$region0: #{agent_forward.1}
  #allocation0 [shape = 'u32[]', space=smem, size = 0x4, offset = 0x4, fixed_abs, tag = 'smem constant byte address 0x4 - core index']
  #allocation1 [shape = 'u32[144,128]{1,0:T(1,128)}', space=vmem, size = 0x12000, scoped, tag = 'internal scratch']
  %s0 = inlined_call_operand.vmem [shape: f32[16,48], index: 0, kind: input, shape index: {}]
  %s1 = inlined_call_operand.hbm [shape: bf16[48,512], index: 1, kind: input, shape index: {}]
  %s2 = inlined_call_operand.vmem [shape: f32[1,512], index: 2, kind: input, shape index: {}]
  %s3 = inlined_call_operand.hbm [shape: bf16[512,256], index: 3, kind: input, shape index: {}]
  %s4 = inlined_call_operand.vmem [shape: f32[1,256], index: 4, kind: input, shape index: {}]
  %s5 = inlined_call_operand.hbm [shape: bf16[256,128], index: 5, kind: input, shape index: {}]
  %s6 = inlined_call_operand.vmem [shape: f32[1,128], index: 6, kind: input, shape index: {}]
  %s7 = inlined_call_operand.hbm [shape: bf16[128,128], index: 7, kind: input, shape index: {}]
  %s8 = inlined_call_operand.vmem [shape: f32[1,128], index: 8, kind: input, shape index: {}]
  %s9 = inlined_call_operand.vmem [shape: f32[16,12], index: 9, kind: output, shape index: {}]
  %s10 = sld [smem:[#allocation0]]
  $region85: #{agent_forward.1} parent=0
    _
  %s12 = ssub.s32 1, %s10
  %s13 = scalar_select 0, %s12, %s10
  $region1: #{agent_forward.1} parent=0
    #allocation2 [shape = 'u8[49152]{0}', space=vmem, size = 0xc000, scoped, tag = 'input window, operand 1, single buffered']
    #allocation3 [shape = 's32[2]{0}', space=sflag, size = 0x8, scoped, tag = 'scoped memory for agent_forward.1']
    #allocation4 [shape = 'u8[262144]{0}', space=vmem, size = 0x40000, scoped, tag = 'input window, operand 3, single buffered']
    #allocation5 [shape = 's32[1]{0}', space=sflag, size = 0x4, scoped, tag = 'scoped memory for agent_forward.1']
    #allocation6 [shape = 'u8[65536]{0}', space=vmem, size = 0x10000, scoped, tag = 'input window, operand 5, single buffered']
    #allocation7 [shape = 'u8[32768]{0}', space=vmem, size = 0x8000, scoped, tag = 'input window, operand 7, single buffered']
    #allocation8 [shape = 's32[1]{0}', space=sflag, size = 0x4, scoped, tag = 'scoped memory for agent_forward.1']
    %14 = vsyncpa [#allocation3], 0
    %15 = vsyncpa [#allocation5], 0
    %16 = vsyncpa [#allocation8], 0
    loop: start=0, step=1, limit=4
    $region2: #{agent_forward.1} parent=1 // loop_pre_header
      _
    $region3: #{agent_forward.1} parent=1 // loop_header
      %s18 = sphi 0, %s22
      %p19 = scmp.ge.s32.totalorder %s18, 4
      %s28 = sphi 0, %s30
      %s31 = sphi 0, %s28
      %s32 = sphi 0, %s31
      %s48 = sphi 0, %s32
      %s52 = sphi 0, %s52
      %s54 = sphi 0, %s52
      %s55 = sphi 0, %s54
      %s69 = sphi 0, %s55
      %s73 = sphi 0, %s73
      %s75 = sphi 0, %s73
      %s76 = sphi 0, %s75
      %s90 = sphi 0, %s76
      %s94 = sphi 0, %s94
      %s96 = sphi 0, %s94
      %s97 = sphi 0, %s96
      %s111 = sphi 0, %s97
      %s115 = sphi 0, %s115
      %s117 = sphi 0, %s115
      %s118 = sphi 0, %s117
      %s132 = sphi 0, %s118
      %s136 = sphi 0, %s136
      %s138 = sphi 0, %s136
      %s139 = sphi 0, %s138
      %s153 = sphi 0, %s139
      %s157 = sphi 0, %s157
      %s159 = sphi 0, %s157
      %s160 = sphi 0, %s159
      %s174 = sphi 0, %s160
      %s178 = sphi 0, %s178
      %s180 = sphi 0, %s178
      %s181 = sphi 0, %s180
      %s195 = sphi 0, %s181
      %s199 = sphi 0, %s199
      %s201 = sphi 0, %s199
      %s202 = sphi 0, %s201
      %s216 = sphi 0, %s202
      %s222 = sphi 0, %s224
      %s225 = sphi 0, %s222
      %s226 = sphi 0, %s225
      %s242 = sphi 0, %s226
    $region4: #{agent_forward.1} parent=1 // loop_header_branch
      %21 = sbr.rel (%p19) target = $region8
    $region5: #{agent_forward.1} parent=1 // loop_body
      %s23 = ssub.s32 %s18, 1
      %s24 = ssub.s32 %s18, 2
      %s25 = sadd.s32 %s18, 1
      %s26 = ssub.s32 %s18, %s25
      %p27 = scmp.eq.s32.totalorder %s26, 0
      %s29 = sadd.s32 %s28, 1
      %s30 = scalar_select %p27, %s28, %s29
      %p33 = pneg %p27
      %p34 = scmp.eq.s32.totalorder %s18, 1
      %p35 = por %p33, %p34
      %p36 = scmp.ne.s32.totalorder %s28, %s31
      %p37 = scmp.eq.s32.totalorder %s18, 0
      %p38 = por %p36, %p37
      %p39 = scmp.ne.s32.totalorder %s28, %s31
      %p40 = scmp.eq.s32.totalorder %s23, 1
      %p41 = por %p39, %p40
      %p42 = scmp.ne.s32.totalorder %s31, %s32
      %p43 = scmp.eq.s32.totalorder %s23, 0
      %p44 = por %p42, %p43
      %p45 = scmp.ne.s32.totalorder %s31, %s32
      %p46 = scmp.eq.s32.totalorder %s24, 1
      %p47 = por %p45, %p46
      %p49 = scmp.ne.s32.totalorder %s32, %s48
      %p50 = scmp.eq.s32.totalorder %s24, 0
      %p51 = por %p49, %p50
      %s53 = sadd.s32 %s52, 1
      %p56 = scmp.eq.s32.totalorder %s18, 1
      %p57 = scmp.ne.s32.totalorder %s52, %s54
      %p58 = scmp.eq.s32.totalorder %s18, 0
      %p59 = por %p57, %p58
      %p60 = scmp.ne.s32.totalorder %s52, %s54
      %p61 = scmp.eq.s32.totalorder %s23, 1
      %p62 = por %p60, %p61
      %p63 = scmp.ne.s32.totalorder %s54, %s55
      %p64 = scmp.eq.s32.totalorder %s23, 0
      %p65 = por %p63, %p64
      %p66 = scmp.ne.s32.totalorder %s54, %s55
      %p67 = scmp.eq.s32.totalorder %s24, 1
      %p68 = por %p66, %p67
      %p70 = scmp.ne.s32.totalorder %s55, %s69
      %p71 = scmp.eq.s32.totalorder %s24, 0
      %p72 = por %p70, %p71
      %s74 = sadd.s32 %s73, 1
      %p77 = scmp.eq.s32.totalorder %s18, 1
      %p78 = scmp.ne.s32.totalorder %s73, %s75
      %p79 = scmp.eq.s32.totalorder %s18, 0
      %p80 = por %p78, %p79
      %p81 = scmp.ne.s32.totalorder %s73, %s75
      %p82 = scmp.eq.s32.totalorder %s23, 1
      %p83 = por %p81, %p82
      %p84 = scmp.ne.s32.totalorder %s75, %s76
      %p85 = scmp.eq.s32.totalorder %s23, 0
      %p86 = por %p84, %p85
      %p87 = scmp.ne.s32.totalorder %s75, %s76
      %p88 = scmp.eq.s32.totalorder %s24, 1
      %p89 = por %p87, %p88
      %p91 = scmp.ne.s32.totalorder %s76, %s90
      %p92 = scmp.eq.s32.totalorder %s24, 0
      %p93 = por %p91, %p92
      %s95 = sadd.s32 %s94, 1
      %p98 = scmp.eq.s32.totalorder %s18, 1
      %p99 = scmp.ne.s32.totalorder %s94, %s96
      %p100 = scmp.eq.s32.totalorder %s18, 0
      %p101 = por %p99, %p100
      %p102 = scmp.ne.s32.totalorder %s94, %s96
      %p103 = scmp.eq.s32.totalorder %s23, 1
      %p104 = por %p102, %p103
      %p105 = scmp.ne.s32.totalorder %s96, %s97
      %p106 = scmp.eq.s32.totalorder %s23, 0
      %p107 = por %p105, %p106
      %p108 = scmp.ne.s32.totalorder %s96, %s97
      %p109 = scmp.eq.s32.totalorder %s24, 1
      %p110 = por %p108, %p109
      %p112 = scmp.ne.s32.totalorder %s97, %s111
      %p113 = scmp.eq.s32.totalorder %s24, 0
      %p114 = por %p112, %p113
      %s116 = sadd.s32 %s115, 1
      %p119 = scmp.eq.s32.totalorder %s18, 1
      %p120 = scmp.ne.s32.totalorder %s115, %s117
      %p121 = scmp.eq.s32.totalorder %s18, 0
      %p122 = por %p120, %p121
      %p123 = scmp.ne.s32.totalorder %s115, %s117
      %p124 = scmp.eq.s32.totalorder %s23, 1
      %p125 = por %p123, %p124
      %p126 = scmp.ne.s32.totalorder %s117, %s118
      %p127 = scmp.eq.s32.totalorder %s23, 0
      %p128 = por %p126, %p127
      %p129 = scmp.ne.s32.totalorder %s117, %s118
      %p130 = scmp.eq.s32.totalorder %s24, 1
      %p131 = por %p129, %p130
      %p133 = scmp.ne.s32.totalorder %s118, %s132
      %p134 = scmp.eq.s32.totalorder %s24, 0
      %p135 = por %p133, %p134
      %s137 = sadd.s32 %s136, 1
      %p140 = scmp.eq.s32.totalorder %s18, 1
      %p141 = scmp.ne.s32.totalorder %s136, %s138
      %p142 = scmp.eq.s32.totalorder %s18, 0
      %p143 = por %p141, %p142
      %p144 = scmp.ne.s32.totalorder %s136, %s138
      %p145 = scmp.eq.s32.totalorder %s23, 1
      %p146 = por %p144, %p145
      %p147 = scmp.ne.s32.totalorder %s138, %s139
      %p148 = scmp.eq.s32.totalorder %s23, 0
      %p149 = por %p147, %p148
      %p150 = scmp.ne.s32.totalorder %s138, %s139
      %p151 = scmp.eq.s32.totalorder %s24, 1
      %p152 = por %p150, %p151
      %p154 = scmp.ne.s32.totalorder %s139, %s153
      %p155 = scmp.eq.s32.totalorder %s24, 0
      %p156 = por %p154, %p155
      %s158 = sadd.s32 %s157, 1
      %p161 = scmp.eq.s32.totalorder %s18, 1
      %p162 = scmp.ne.s32.totalorder %s157, %s159
      %p163 = scmp.eq.s32.totalorder %s18, 0
      %p164 = por %p162, %p163
      %p165 = scmp.ne.s32.totalorder %s157, %s159
      %p166 = scmp.eq.s32.totalorder %s23, 1
      %p167 = por %p165, %p166
      %p168 = scmp.ne.s32.totalorder %s159, %s160
      %p169 = scmp.eq.s32.totalorder %s23, 0
      %p170 = por %p168, %p169
      %p171 = scmp.ne.s32.totalorder %s159, %s160
      %p172 = scmp.eq.s32.totalorder %s24, 1
      %p173 = por %p171, %p172
      %p175 = scmp.ne.s32.totalorder %s160, %s174
      %p176 = scmp.eq.s32.totalorder %s24, 0
      %p177 = por %p175, %p176
      %s179 = sadd.s32 %s178, 1
      %p182 = scmp.eq.s32.totalorder %s18, 1
      %p183 = scmp.ne.s32.totalorder %s178, %s180
      %p184 = scmp.eq.s32.totalorder %s18, 0
      %p185 = por %p183, %p184
      %p186 = scmp.ne.s32.totalorder %s178, %s180
      %p187 = scmp.eq.s32.totalorder %s23, 1
      %p188 = por %p186, %p187
      %p189 = scmp.ne.s32.totalorder %s180, %s181
      %p190 = scmp.eq.s32.totalorder %s23, 0
      %p191 = por %p189, %p190
      %p192 = scmp.ne.s32.totalorder %s180, %s181
      %p193 = scmp.eq.s32.totalorder %s24, 1
      %p194 = por %p192, %p193
      %p196 = scmp.ne.s32.totalorder %s181, %s195
      %p197 = scmp.eq.s32.totalorder %s24, 0
      %p198 = por %p196, %p197
      %s200 = sadd.s32 %s199, 1
      %p203 = scmp.eq.s32.totalorder %s18, 1
      %p204 = scmp.ne.s32.totalorder %s199, %s201
      %p205 = scmp.eq.s32.totalorder %s18, 0
      %p206 = por %p204, %p205
      %p207 = scmp.ne.s32.totalorder %s199, %s201
      %p208 = scmp.eq.s32.totalorder %s23, 1
      %p209 = por %p207, %p208
      %p210 = scmp.ne.s32.totalorder %s201, %s202
      %p211 = scmp.eq.s32.totalorder %s23, 0
      %p212 = por %p210, %p211
      %p213 = scmp.ne.s32.totalorder %s201, %s202
      %p214 = scmp.eq.s32.totalorder %s24, 1
      %p215 = por %p213, %p214
      %p217 = scmp.ne.s32.totalorder %s202, %s216
      %p218 = scmp.eq.s32.totalorder %s24, 0
      %p219 = por %p217, %p218
      %s220 = ssub.s32 %s18, %s25
      %p221 = scmp.eq.s32.totalorder %s220, 0
      %s223 = sadd.s32 %s222, 1
      %s224 = scalar_select %p221, %s222, %s223
      %p227 = pneg %p221
      %p228 = scmp.eq.s32.totalorder %s18, 1
      %p229 = por %p227, %p228
      %p230 = scmp.ne.s32.totalorder %s222, %s225
      %p231 = scmp.eq.s32.totalorder %s18, 0
      %p232 = por %p230, %p231
      %p233 = scmp.ne.s32.totalorder %s222, %s225
      %p234 = scmp.eq.s32.totalorder %s23, 1
      %p235 = por %p233, %p234
      %p236 = scmp.ne.s32.totalorder %s225, %s226
      %p237 = scmp.eq.s32.totalorder %s23, 0
      %p238 = por %p236, %p237
      %p239 = scmp.ne.s32.totalorder %s225, %s226
      %p240 = scmp.eq.s32.totalorder %s24, 1
      %p241 = por %p239, %p240
      %p243 = scmp.ne.s32.totalorder %s226, %s242
      %p244 = scmp.eq.s32.totalorder %s24, 0
      %p245 = por %p243, %p244
      %p246 = scmp.le.s32.totalorder 1, %s18
      %p247 = scmp.lt.s32.totalorder %s18, 3
      %p248 = pnand %p246, %p247
      %p249 = pneg %p248
      // Predicated region
      $region9: #{agent_forward.1} parent=5 // pred_check
        _
      $region10: #{agent_forward.1} parent=5 // pred_check_branch
        %251 = sbr.rel (%p248) target = $region12
      $region11: #{agent_forward.1} parent=5 // pred_region
        %s252 = ssub.s32 %s18, 1
        // Predicated region
        $region13: #{agent_forward.1} parent=11 // pred_check
          %p253 = pneg %p65
        $region14: #{agent_forward.1} parent=11 // pred_check_branch
          %255 = sbr.rel (%p253) target = $region16
        $region15: #{agent_forward.1} parent=11 // pred_region
          %s257 = ssub.s32 1536, 1536
          %258 = vsyncadd [#allocation3], %s257
          %s259 = sshll.u32 [#allocation2], 4
          %s260 = int_to_ptr.vmem [resolvable:$true] %s259
          %265 = dma.hbm_to_vmem [thread:$0]  %s1, 1536, %s260, [#allocation3], 256, 256, 16
        $region16: #{agent_forward.1} parent=11 // pred_fallthru
          _
        // Predicated region
        $region17: #{agent_forward.1} parent=11 // pred_check
          %p266 = pneg %p86
        $region18: #{agent_forward.1} parent=11 // pred_check_branch
          %268 = sbr.rel (%p266) target = $region20
        $region19: #{agent_forward.1} parent=11 // pred_region
          _
        $region20: #{agent_forward.1} parent=11 // pred_fallthru
          _
        // Predicated region
        $region21: #{agent_forward.1} parent=11 // pred_check
          %p269 = pneg %p107
        $region22: #{agent_forward.1} parent=11 // pred_check_branch
          %271 = sbr.rel (%p269) target = $region24
        $region23: #{agent_forward.1} parent=11 // pred_region
          %s273 = ssub.s32 8192, 8192
          %274 = vsyncadd [#allocation5], %s273
          %s275 = sshll.u32 [#allocation4], 4
          %s276 = int_to_ptr.vmem [resolvable:$true] %s275
          %281 = dma.hbm_to_vmem [thread:$0]  %s3, 8192, %s276, [#allocation5], 128, 128, 8
        $region24: #{agent_forward.1} parent=11 // pred_fallthru
          _
        // Predicated region
        $region25: #{agent_forward.1} parent=11 // pred_check
          %p282 = pneg %p128
        $region26: #{agent_forward.1} parent=11 // pred_check_branch
          %284 = sbr.rel (%p282) target = $region28
        $region27: #{agent_forward.1} parent=11 // pred_region
          _
        $region28: #{agent_forward.1} parent=11 // pred_fallthru
          _
        // Predicated region
        $region29: #{agent_forward.1} parent=11 // pred_check
          %p285 = pneg %p149
        $region30: #{agent_forward.1} parent=11 // pred_check_branch
          %287 = sbr.rel (%p285) target = $region32
        $region31: #{agent_forward.1} parent=11 // pred_region
          %s289 = ssub.s32 2048, 2048
          %290 = vsyncadd [#allocation5], %s289
          %s291 = sshll.u32 [#allocation6], 4
          %s292 = int_to_ptr.vmem [resolvable:$true] %s291
          %297 = dma.hbm_to_vmem [thread:$0]  %s5, 2048, %s292, [#allocation5], 64, 64, 4
        $region32: #{agent_forward.1} parent=11 // pred_fallthru
          _
        // Predicated region
        $region33: #{agent_forward.1} parent=11 // pred_check
          %p298 = pneg %p170
        $region34: #{agent_forward.1} parent=11 // pred_check_branch
          %300 = sbr.rel (%p298) target = $region36
        $region35: #{agent_forward.1} parent=11 // pred_region
          _
        $region36: #{agent_forward.1} parent=11 // pred_fallthru
          _
        // Predicated region
        $region37: #{agent_forward.1} parent=11 // pred_check
          %p301 = pneg %p191
        $region38: #{agent_forward.1} parent=11 // pred_check_branch
          %303 = sbr.rel (%p301) target = $region40
        $region39: #{agent_forward.1} parent=11 // pred_region
          %s305 = ssub.s32 1024, 1024
          %306 = vsyncadd [#allocation8], %s305
          %s307 = sshll.u32 [#allocation7], 4
          %s308 = int_to_ptr.vmem [resolvable:$true] %s307
          %313 = dma.hbm_to_vmem [thread:$0]  %s7, 1024, %s308, [#allocation8], 64, 64, 4
        $region40: #{agent_forward.1} parent=11 // pred_fallthru
          _
        // Predicated region
        $region41: #{agent_forward.1} parent=11 // pred_check
          %p314 = pneg %p212
        $region42: #{agent_forward.1} parent=11 // pred_check_branch
          %316 = sbr.rel (%p314) target = $region44
        $region43: #{agent_forward.1} parent=11 // pred_region
          _
        $region44: #{agent_forward.1} parent=11 // pred_fallthru
          _
      $region12: #{agent_forward.1} parent=5 // pred_fallthru
        _
      %p317 = scmp.lt.s32.totalorder %s18, 2
      // Predicated region
      $region45: #{agent_forward.1} parent=5 // pred_check
        %p318 = pneg %p317
      $region46: #{agent_forward.1} parent=5 // pred_check_branch
        %320 = sbr.rel (%p318) target = $region48
      $region47: #{agent_forward.1} parent=5 // pred_region
        // Predicated region
        $region49: #{agent_forward.1} parent=47 // pred_check
          %p321 = pneg %p38
        $region50: #{agent_forward.1} parent=47 // pred_check_branch
          %323 = sbr.rel (%p321) target = $region52
        $region51: #{agent_forward.1} parent=47 // pred_region
          %p324 = scmp.lt.s32.totalorder %s18, 1
          %s325 = scalar_select %p324, %s18, 1
          %s326 = smul.addr %s325, 8
          %s327 = scalar_lea.vmem %s0, %s326
        $region52: #{agent_forward.1} parent=47 // pred_fallthru
          _
      $region48: #{agent_forward.1} parent=5 // pred_fallthru
        _
      %p328 = scmp.le.s32.totalorder 1, %s18
      %p329 = scmp.lt.s32.totalorder %s18, 3
      %p330 = pnand %p328, %p329
      %p331 = pneg %p330
      // Predicated region
      $region53: #{agent_forward.1} parent=5 // pred_check
        _
      $region54: #{agent_forward.1} parent=5 // pred_check_branch
        %333 = sbr.rel (%p330) target = $region56
      $region55: #{agent_forward.1} parent=5 // pred_region
        %s334 = ssub.s32 %s18, 1
        // Predicated region
        $region57: #{agent_forward.1} parent=55 // pred_check
          %p335 = pneg %p65
        $region58: #{agent_forward.1} parent=55 // pred_check_branch
          %337 = sbr.rel (%p335) target = $region60
        $region59: #{agent_forward.1} parent=55 // pred_region
          %338 = dma.done [#allocation3], 1536
        $region60: #{agent_forward.1} parent=55 // pred_fallthru
          _
        // Predicated region
        $region61: #{agent_forward.1} parent=55 // pred_check
          %p339 = pneg %p107
        $region62: #{agent_forward.1} parent=55 // pred_check_branch
          %341 = sbr.rel (%p339) target = $region64
        $region63: #{agent_forward.1} parent=55 // pred_region
          %342 = dma.done [#allocation5], 8192
        $region64: #{agent_forward.1} parent=55 // pred_fallthru
          _
        // Predicated region
        $region65: #{agent_forward.1} parent=55 // pred_check
          %p343 = pneg %p149
        $region66: #{agent_forward.1} parent=55 // pred_check_branch
          %345 = sbr.rel (%p343) target = $region68
        $region67: #{agent_forward.1} parent=55 // pred_region
          %346 = dma.done [#allocation5], 2048
        $region68: #{agent_forward.1} parent=55 // pred_fallthru
          _
        // Predicated region
        $region69: #{agent_forward.1} parent=55 // pred_check
          %p347 = pneg %p191
        $region70: #{agent_forward.1} parent=55 // pred_check_branch
          %349 = sbr.rel (%p347) target = $region72
        $region71: #{agent_forward.1} parent=55 // pred_region
          %350 = dma.done [#allocation8], 1024
        $region72: #{agent_forward.1} parent=55 // pred_fallthru
          _
        %p351 = scmp.lt.s32.totalorder %s23, 1
        %s352 = scalar_select %p351, %s23, 1
        %s353 = smul.addr %s352, 8
        %s354 = scalar_lea.vmem %s0, %s353
        %p355 = pneg %p44
        %p356 = pneg %p41
        %p357 = pneg %p65
        %p358 = pneg %p62
        %p359 = pneg %p86
        %p360 = pneg %p83
        %p361 = pneg %p107
        %p362 = pneg %p104
        %p363 = pneg %p128
        %p364 = pneg %p125
        %p365 = pneg %p149
        %p366 = pneg %p146
        %p367 = pneg %p170
        %p368 = pneg %p167
        %p369 = pneg %p191
        %p370 = pneg %p188
        %p371 = pneg %p212
        %p372 = pneg %p209
        %p373 = pneg %p238
        %p374 = pneg %p235
        %p375 = scmp.lt.s32.totalorder %s23, 1
        %s376 = scalar_select %p375, %s23, 1
        %s377 = smul.addr %s376, 8
        %s378 = scalar_lea.vmem %s9, %s377
        %p379 = scmp.lt.s32.totalorder %s23, 1
        %s380 = scalar_select %p379, %s23, 1
        %s381 = smul.addr %s380, 8
        %s382 = scalar_lea.vmem %s0, %s381
        %p383 = scmp.lt.s32.totalorder %s23, 1
        %s384 = scalar_select %p383, %s23, 1
        %s385 = smul.addr %s384, 8
        %s386 = scalar_lea.vmem %s9, %s385
        %v389 = vld [vmem:[%s382] sm:$0xff]
        %v390 = vpack.c.bf16 %v389, %v389
        %v391 = vld [vmem:[#allocation2] sm:$0xff]
        %v392 = vld [vmem:[#allocation2 + $0x8] sm:$0xff]
        %v393 = vld [vmem:[#allocation2 + $0x10] sm:$0xff]
        %v394 = vld [vmem:[#allocation2 + $0x18] sm:$0xff]
        %v395 = vld [vmem:[#allocation2 + $0x20] sm:$0xff]
        %v396 = vld [vmem:[#allocation2 + $0x28] sm:$0xff]
        %v397 = vld [vmem:[#allocation2 + $0x30] sm:$0xff]
        %v398 = vld [vmem:[#allocation2 + $0x38] sm:$0xff]
        %v399 = vld [vmem:[#allocation2 + $0x40] sm:$0xff]
        %v400 = vld [vmem:[#allocation2 + $0x48] sm:$0xff]
        %v401 = vld [vmem:[#allocation2 + $0x50] sm:$0xff]
        %v402 = vld [vmem:[#allocation2 + $0x58] sm:$0xff]
        %v403 = vld [vmem:[%s2] sm:$0xf]
        %v405 = vlaneseq
        %v406 = vshrl.u32 %v405, 7
        %v407 = vsub.s32 0, %v406
        %v408 = vrot.slane %v403, %v407
        %v409 = vlaneseq
        %v410 = vshrl.u32 %v409, 7
        %v411 = vsub.s32 1, %v410
        %v412 = vrot.slane %v403, %v411
        %v413 = vlaneseq
        %v414 = vshrl.u32 %v413, 7
        %v415 = vsub.s32 2, %v414
        %v416 = vrot.slane %v403, %v415
        %v417 = vlaneseq
        %v418 = vshrl.u32 %v417, 7
        %v419 = vsub.s32 3, %v418
        %v420 = vrot.slane %v403, %v419
        %v437 = vunpack.c.l.b16 %v391
        %v438 = vunpack.c.h.b16 %v391
        %v439 = vunpack.c.l.b16 %v392
        %v440 = vunpack.c.h.b16 %v392
        %v441 = vunpack.c.l.b16 %v393
        %v442 = vunpack.c.h.b16 %v393
        %v443 = vunpack.c.l.b16 %v394
        %v444 = vunpack.c.h.b16 %v394
        %v445 = vunpack.c.l.b16 %v395
        %v446 = vunpack.c.h.b16 %v395
        %v447 = vunpack.c.l.b16 %v396
        %v448 = vunpack.c.h.b16 %v396
        %v449 = vunpack.c.l.b16 %v397
        %v450 = vunpack.c.h.b16 %v397
        %v451 = vunpack.c.l.b16 %v398
        %v452 = vunpack.c.h.b16 %v398
        %v453 = vunpack.c.l.b16 %v399
        %v454 = vunpack.c.h.b16 %v399
        %v455 = vunpack.c.l.b16 %v400
        %v456 = vunpack.c.h.b16 %v400
        %v457 = vunpack.c.l.b16 %v401
        %v458 = vunpack.c.h.b16 %v401
        %v459 = vunpack.c.l.b16 %v402
        %v460 = vunpack.c.h.b16 %v402
        %v461 = vpack.c.b16 %v441, %v437
        %v462 = vpack.c.b16 %v442, %v438
        %v463 = vpack.c.b16 %v443, %v439
        %v464 = vpack.c.b16 %v444, %v440
        %v465 = vpack.c.b16 %v449, %v445
        %v466 = vpack.c.b16 %v450, %v446
        %v467 = vpack.c.b16 %v451, %v447
        %v468 = vpack.c.b16 %v452, %v448
        %v469 = vpack.c.b16 %v457, %v453
        %v470 = vpack.c.b16 %v458, %v454
        %v471 = vpack.c.b16 %v459, %v455
        %v472 = vpack.c.b16 %v460, %v456
        %vm485 = vcmask 392192
        %v487 = vsel %vm485, %v390, 0
        %489 = vmatprep.subr.bf16.mxu0 %v462
        %490 = vmatpush1.bf16.msra.mxu0 %v461
        %491 = vmatprep.subr.bf16.mxu0 %v466
        %492 = vmatpush1.bf16.msra.mxu0 %v465
        %493 = vmatprep.subr.bf16.mxu0 %v470
        %494 = vmatpush1.bf16.msra.mxu0 %v469
        %495 = vmatprep.subr.bf16.mxu0 0
        %496 = vmatpush1.bf16.msra.mxu0 0
        %497 = vmatprep.subr.bf16.mxu0 0
        %498 = vmatpush1.bf16.msra.mxu0 0
        %499 = vmatprep.subr.bf16.mxu0 0
        %500 = vmatpush1.bf16.msra.mxu0 0
        %501 = vmatprep.subr.bf16.mxu0 0
        %502 = vmatpush1.bf16.msra.mxu0 0
        %503 = vmatprep.subr.bf16.mxu0 0
        %504 = vmatpush1.bf16.msra.mxu0 0
        %505 = vmatprep.subr.bf16.mxu0 0
        %506 = vmatpush1.bf16.msra.mxu0 0
        %507 = vmatprep.subr.bf16.mxu0 0
        %508 = vmatpush1.bf16.msra.mxu0 0
        %509 = vmatprep.subr.bf16.mxu0 0
        %510 = vmatpush1.bf16.msra.mxu0 0
        %511 = vmatprep.subr.bf16.mxu0 0
        %512 = vmatpush1.bf16.msra.mxu0 0
        %513 = vmatprep.subr.bf16.mxu0 0
        %514 = vmatpush1.bf16.msra.mxu0 0
        %515 = vmatprep.subr.bf16.mxu0 0
        %516 = vmatpush1.bf16.msra.mxu0 0
        %517 = vmatprep.subr.bf16.mxu0 0
        %518 = vmatpush1.bf16.msra.mxu0 0
        %519 = vmatprep.subr.bf16.mxu0 0
        %520 = vmatpush1.bf16.msra.mxu0 0
        %521 = vmatprep.mubr.bf16.mxu0 0
        %522 = vmatmul.mubr.bf16.gmra.mrb[0].mxu0 %v487
        %v523 = vpop.f32.mrb[0].mxu0
        %v524 = vadd.f32 %v408, %v523
        %v525 = vpop.f32.mrb[0].mxu0
        %v526 = vadd.f32 %v412, %v525
        %v527 = vpop.f32.mrb[0].mxu0
        %v528 = vpop.f32.mrb[0].mxu0
        %529 = vdwg.mxu0
        %530 = vmatprep.subr.bf16.mxu0 %v464
        %531 = vmatpush1.bf16.msra.mxu0 %v463
        %532 = vmatprep.subr.bf16.mxu0 %v468
        %533 = vmatpush1.bf16.msra.mxu0 %v467
        %534 = vmatprep.subr.bf16.mxu0 %v472
        %535 = vmatpush1.bf16.msra.mxu0 %v471
        %536 = vmatprep.subr.bf16.mxu0 0
        %537 = vmatpush1.bf16.msra.mxu0 0
        %538 = vmatprep.subr.bf16.mxu0 0
        %539 = vmatpush1.bf16.msra.mxu0 0
        %540 = vmatprep.subr.bf16.mxu0 0
        %541 = vmatpush1.bf16.msra.mxu0 0
        %542 = vmatprep.subr.bf16.mxu0 0
        %543 = vmatpush1.bf16.msra.mxu0 0
        %544 = vmatprep.subr.bf16.mxu0 0
        %545 = vmatpush1.bf16.msra.mxu0 0
        %546 = vmatprep.subr.bf16.mxu0 0
        %547 = vmatpush1.bf16.msra.mxu0 0
        %548 = vmatprep.subr.bf16.mxu0 0
        %549 = vmatpush1.bf16.msra.mxu0 0
        %550 = vmatprep.subr.bf16.mxu0 0
        %551 = vmatpush1.bf16.msra.mxu0 0
        %552 = vmatprep.subr.bf16.mxu0 0
        %553 = vmatpush1.bf16.msra.mxu0 0
        %554 = vmatprep.subr.bf16.mxu0 0
        %555 = vmatpush1.bf16.msra.mxu0 0
        %556 = vmatprep.subr.bf16.mxu0 0
        %557 = vmatpush1.bf16.msra.mxu0 0
        %558 = vmatprep.subr.bf16.mxu0 0
        %559 = vmatpush1.bf16.msra.mxu0 0
        %560 = vmatprep.subr.bf16.mxu0 0
        %561 = vmatpush1.bf16.msra.mxu0 0
        %562 = vmatprep.mubr.bf16.mxu0 0
        %563 = vmatmul.mubr.bf16.gmra.mrb[0].mxu0 %v487
        %v564 = vpop.f32.mrb[0].mxu0
        %v565 = vadd.f32 %v416, %v564
        %v566 = vpop.f32.mrb[0].mxu0
        %v567 = vadd.f32 %v420, %v566
        %v568 = vpop.f32.mrb[0].mxu0
        %v569 = vpop.f32.mrb[0].mxu0
        %570 = vdwg.mxu0
        %v571 = vpack.c.bf16 %v524, %v524
        %v572 = vpack.c.bf16 %v526, %v526
        %v573 = vpack.c.bf16 %v565, %v565
        %v574 = vpack.c.bf16 %v567, %v567
        %vm575 = vcmp.gt.bf16.partialorder %v571, 0
        %vm576 = vcmp.gt.bf16.partialorder %v572, 0
        %vm577 = vcmp.gt.bf16.partialorder %v573, 0
        %vm578 = vcmp.gt.bf16.partialorder %v574, 0
        %v580 = vmul.bf16 %v571, 1069105081
        %v581 = vpow.bf16.pop %v580
        %v583 = vmul.bf16 %v572, 1069105081
        %v584 = vpow.bf16.pop %v583
        %v586 = vmul.bf16 %v573, 1069105081
        %v587 = vpow.bf16.pop %v586
        %v589 = vmul.bf16 %v574, 1069105081
        %v590 = vpow.bf16.pop %v589
        %v591 = vsub.bf16 %v581, 1065369472
        %v592 = vsub.bf16 %v584, 1065369472
        %v593 = vsub.bf16 %v587, 1065369472
        %v594 = vsub.bf16 %v590, 1065369472
        %v595 = vsel %vm575, %v571, %v591
        %v596 = vsel %vm576, %v572, %v592
        %v597 = vsel %vm577, %v573, %v593
        %v598 = vsel %vm578, %v574, %v594
        %v599 = vld [vmem:[#allocation4] sm:$0xff]
        %v600 = vld [vmem:[#allocation4 + $0x8] sm:$0xff]
        %v601 = vld [vmem:[#allocation4 + $0x10] sm:$0xff]
        %v602 = vld [vmem:[#allocation4 + $0x18] sm:$0xff]
        %v603 = vld [vmem:[#allocation4 + $0x20] sm:$0xff]
        %v604 = vld [vmem:[#allocation4 + $0x28] sm:$0xff]
        %v605 = vld [vmem:[#allocation4 + $0x30] sm:$0xff]
        %v606 = vld [vmem:[#allocation4 + $0x38] sm:$0xff]
        %v607 = vld [vmem:[#allocation4 + $0x40] sm:$0xff]
        %v608 = vld [vmem:[#allocation4 + $0x48] sm:$0xff]
        %v609 = vld [vmem:[#allocation4 + $0x50] sm:$0xff]
        %v610 = vld [vmem:[#allocation4 + $0x58] sm:$0xff]
        %v611 = vld [vmem:[#allocation4 + $0x60] sm:$0xff]
        %v612 = vld [vmem:[#allocation4 + $0x68] sm:$0xff]
        %v613 = vld [vmem:[#allocation4 + $0x70] sm:$0xff]
        %v614 = vld [vmem:[#allocation4 + $0x78] sm:$0xff]
        %v615 = vld [vmem:[#allocation4 + $0x80] sm:$0xff]
        %v616 = vld [vmem:[#allocation4 + $0x88] sm:$0xff]
        %v617 = vld [vmem:[#allocation4 + $0x90] sm:$0xff]
        %v618 = vld [vmem:[#allocation4 + $0x98] sm:$0xff]
        %v619 = vld [vmem:[#allocation4 + $0xa0] sm:$0xff]
        %v620 = vld [vmem:[#allocation4 + $0xa8] sm:$0xff]
        %v621 = vld [vmem:[#allocation4 + $0xb0] sm:$0xff]
        %v622 = vld [vmem:[#allocation4 + $0xb8] sm:$0xff]
        %v623 = vld [vmem:[#allocation4 + $0xc0] sm:$0xff]
        %v624 = vld [vmem:[#allocation4 + $0xc8] sm:$0xff]
        %v625 = vld [vmem:[#allocation4 + $0xd0] sm:$0xff]
        %v626 = vld [vmem:[#allocation4 + $0xd8] sm:$0xff]
        %v627 = vld [vmem:[#allocation4 + $0xe0] sm:$0xff]
        %v628 = vld [vmem:[#allocation4 + $0xe8] sm:$0xff]
        %v629 = vld [vmem:[#allocation4 + $0xf0] sm:$0xff]
        %v630 = vld [vmem:[#allocation4 + $0xf8] sm:$0xff]
        %v631 = vld [vmem:[#allocation4 + $0x100] sm:$0xff]
        %v632 = vld [vmem:[#allocation4 + $0x108] sm:$0xff]
        %v633 = vld [vmem:[#allocation4 + $0x110] sm:$0xff]
        %v634 = vld [vmem:[#allocation4 + $0x118] sm:$0xff]
        %v635 = vld [vmem:[#allocation4 + $0x120] sm:$0xff]
        %v636 = vld [vmem:[#allocation4 + $0x128] sm:$0xff]
        %v637 = vld [vmem:[#allocation4 + $0x130] sm:$0xff]
        %v638 = vld [vmem:[#allocation4 + $0x138] sm:$0xff]
        %v639 = vld [vmem:[#allocation4 + $0x140] sm:$0xff]
        %v640 = vld [vmem:[#allocation4 + $0x148] sm:$0xff]
        %v641 = vld [vmem:[#allocation4 + $0x150] sm:$0xff]
        %v642 = vld [vmem:[#allocation4 + $0x158] sm:$0xff]
        %v643 = vld [vmem:[#allocation4 + $0x160] sm:$0xff]
        %v644 = vld [vmem:[#allocation4 + $0x168] sm:$0xff]
        %v645 = vld [vmem:[#allocation4 + $0x170] sm:$0xff]
        %v646 = vld [vmem:[#allocation4 + $0x178] sm:$0xff]
        %v647 = vld [vmem:[#allocation4 + $0x180] sm:$0xff]
        %v648 = vld [vmem:[#allocation4 + $0x188] sm:$0xff]
        %v649 = vld [vmem:[#allocation4 + $0x190] sm:$0xff]
        %v650 = vld [vmem:[#allocation4 + $0x198] sm:$0xff]
        %v651 = vld [vmem:[#allocation4 + $0x1a0] sm:$0xff]
        %v652 = vld [vmem:[#allocation4 + $0x1a8] sm:$0xff]
        %v653 = vld [vmem:[#allocation4 + $0x1b0] sm:$0xff]
        %v654 = vld [vmem:[#allocation4 + $0x1b8] sm:$0xff]
        %v655 = vld [vmem:[#allocation4 + $0x1c0] sm:$0xff]
        %v656 = vld [vmem:[#allocation4 + $0x1c8] sm:$0xff]
        %v657 = vld [vmem:[#allocation4 + $0x1d0] sm:$0xff]
        %v658 = vld [vmem:[#allocation4 + $0x1d8] sm:$0xff]
        %v659 = vld [vmem:[#allocation4 + $0x1e0] sm:$0xff]
        %v660 = vld [vmem:[#allocation4 + $0x1e8] sm:$0xff]
        %v661 = vld [vmem:[#allocation4 + $0x1f0] sm:$0xff]
        %v662 = vld [vmem:[#allocation4 + $0x1f8] sm:$0xff]
        %v663 = vld [vmem:[%s4] sm:$0x3]
        %v665 = vlaneseq
        %v666 = vshrl.u32 %v665, 7
        %v667 = vsub.s32 0, %v666
        %v668 = vrot.slane %v663, %v667
        %v669 = vlaneseq
        %v670 = vshrl.u32 %v669, 7
        %v671 = vsub.s32 1, %v670
        %v672 = vrot.slane %v663, %v671
        %v739 = vunpack.c.l.b16 %v599
        %v740 = vunpack.c.h.b16 %v599
        %v741 = vunpack.c.l.b16 %v600
        %v742 = vunpack.c.h.b16 %v600
        %v743 = vunpack.c.l.b16 %v601
        %v744 = vunpack.c.h.b16 %v601
        %v745 = vunpack.c.l.b16 %v602
        %v746 = vunpack.c.h.b16 %v602
        %v747 = vunpack.c.l.b16 %v603
        %v748 = vunpack.c.h.b16 %v603
        %v749 = vunpack.c.l.b16 %v604
        %v750 = vunpack.c.h.b16 %v604
        %v751 = vunpack.c.l.b16 %v605
        %v752 = vunpack.c.h.b16 %v605
        %v753 = vunpack.c.l.b16 %v606
        %v754 = vunpack.c.h.b16 %v606
        %v755 = vunpack.c.l.b16 %v607
        %v756 = vunpack.c.h.b16 %v607
        %v757 = vunpack.c.l.b16 %v608
        %v758 = vunpack.c.h.b16 %v608
        %v759 = vunpack.c.l.b16 %v609
        %v760 = vunpack.c.h.b16 %v609
        %v761 = vunpack.c.l.b16 %v610
        %v762 = vunpack.c.h.b16 %v610
        %v763 = vunpack.c.l.b16 %v611
        %v764 = vunpack.c.h.b16 %v611
        %v765 = vunpack.c.l.b16 %v612
        %v766 = vunpack.c.h.b16 %v612
        %v767 = vunpack.c.l.b16 %v613
        %v768 = vunpack.c.h.b16 %v613
        %v769 = vunpack.c.l.b16 %v614
        %v770 = vunpack.c.h.b16 %v614
        %v771 = vunpack.c.l.b16 %v615
        %v772 = vunpack.c.h.b16 %v615
        %v773 = vunpack.c.l.b16 %v616
        %v774 = vunpack.c.h.b16 %v616
        %v775 = vunpack.c.l.b16 %v617
        %v776 = vunpack.c.h.b16 %v617
        %v777 = vunpack.c.l.b16 %v618
        %v778 = vunpack.c.h.b16 %v618
        %v779 = vunpack.c.l.b16 %v619
        %v780 = vunpack.c.h.b16 %v619
        %v781 = vunpack.c.l.b16 %v620
        %v782 = vunpack.c.h.b16 %v620
        %v783 = vunpack.c.l.b16 %v621
        %v784 = vunpack.c.h.b16 %v621
        %v785 = vunpack.c.l.b16 %v622
        %v786 = vunpack.c.h.b16 %v622
        %v787 = vunpack.c.l.b16 %v623
        %v788 = vunpack.c.h.b16 %v623
        %v789 = vunpack.c.l.b16 %v624
        %v790 = vunpack.c.h.b16 %v624
        %v791 = vunpack.c.l.b16 %v625
        %v792 = vunpack.c.h.b16 %v625
        %v793 = vunpack.c.l.b16 %v626
        %v794 = vunpack.c.h.b16 %v626
        %v795 = vunpack.c.l.b16 %v627
        %v796 = vunpack.c.h.b16 %v627
        %v797 = vunpack.c.l.b16 %v628
        %v798 = vunpack.c.h.b16 %v628
        %v799 = vunpack.c.l.b16 %v629
        %v800 = vunpack.c.h.b16 %v629
        %v801 = vunpack.c.l.b16 %v630
        %v802 = vunpack.c.h.b16 %v630
        %v803 = vunpack.c.l.b16 %v631
        %v804 = vunpack.c.h.b16 %v631
        %v805 = vunpack.c.l.b16 %v632
        %v806 = vunpack.c.h.b16 %v632
        %v807 = vunpack.c.l.b16 %v633
        %v808 = vunpack.c.h.b16 %v633
        %v809 = vunpack.c.l.b16 %v634
        %v810 = vunpack.c.h.b16 %v634
        %v811 = vunpack.c.l.b16 %v635
        %v812 = vunpack.c.h.b16 %v635
        %v813 = vunpack.c.l.b16 %v636
        %v814 = vunpack.c.h.b16 %v636
        %v815 = vunpack.c.l.b16 %v637
        %v816 = vunpack.c.h.b16 %v637
        %v817 = vunpack.c.l.b16 %v638
        %v818 = vunpack.c.h.b16 %v638
        %v819 = vunpack.c.l.b16 %v639
        %v820 = vunpack.c.h.b16 %v639
        %v821 = vunpack.c.l.b16 %v640
        %v822 = vunpack.c.h.b16 %v640
        %v823 = vunpack.c.l.b16 %v641
        %v824 = vunpack.c.h.b16 %v641
        %v825 = vunpack.c.l.b16 %v642
        %v826 = vunpack.c.h.b16 %v642
        %v827 = vunpack.c.l.b16 %v643
        %v828 = vunpack.c.h.b16 %v643
        %v829 = vunpack.c.l.b16 %v644
        %v830 = vunpack.c.h.b16 %v644
        %v831 = vunpack.c.l.b16 %v645
        %v832 = vunpack.c.h.b16 %v645
        %v833 = vunpack.c.l.b16 %v646
        %v834 = vunpack.c.h.b16 %v646
        %v835 = vunpack.c.l.b16 %v647
        %v836 = vunpack.c.h.b16 %v647
        %v837 = vunpack.c.l.b16 %v648
        %v838 = vunpack.c.h.b16 %v648
        %v839 = vunpack.c.l.b16 %v649
        %v840 = vunpack.c.h.b16 %v649
        %v841 = vunpack.c.l.b16 %v650
        %v842 = vunpack.c.h.b16 %v650
        %v843 = vunpack.c.l.b16 %v651
        %v844 = vunpack.c.h.b16 %v651
        %v845 = vunpack.c.l.b16 %v652
        %v846 = vunpack.c.h.b16 %v652
        %v847 = vunpack.c.l.b16 %v653
        %v848 = vunpack.c.h.b16 %v653
        %v849 = vunpack.c.l.b16 %v654
        %v850 = vunpack.c.h.b16 %v654
        %v851 = vunpack.c.l.b16 %v655
        %v852 = vunpack.c.h.b16 %v655
        %v853 = vunpack.c.l.b16 %v656
        %v854 = vunpack.c.h.b16 %v656
        %v855 = vunpack.c.l.b16 %v657
        %v856 = vunpack.c.h.b16 %v657
        %v857 = vunpack.c.l.b16 %v658
        %v858 = vunpack.c.h.b16 %v658
        %v859 = vunpack.c.l.b16 %v659
        %v860 = vunpack.c.h.b16 %v659
        %v861 = vunpack.c.l.b16 %v660
        %v862 = vunpack.c.h.b16 %v660
        %v863 = vunpack.c.l.b16 %v661
        %v864 = vunpack.c.h.b16 %v661
        %v865 = vunpack.c.l.b16 %v662
        %v866 = vunpack.c.h.b16 %v662
        %v867 = vpack.c.b16 %v741, %v739
        %v868 = vpack.c.b16 %v742, %v740
        %v869 = vpack.c.b16 %v745, %v743
        %v870 = vpack.c.b16 %v746, %v744
        %v871 = vpack.c.b16 %v749, %v747
        %v872 = vpack.c.b16 %v750, %v748
        %v873 = vpack.c.b16 %v753, %v751
        %v874 = vpack.c.b16 %v754, %v752
        %v875 = vpack.c.b16 %v757, %v755
        %v876 = vpack.c.b16 %v758, %v756
        %v877 = vpack.c.b16 %v761, %v759
        %v878 = vpack.c.b16 %v762, %v760
        %v879 = vpack.c.b16 %v765, %v763
        %v880 = vpack.c.b16 %v766, %v764
        %v881 = vpack.c.b16 %v769, %v767
        %v882 = vpack.c.b16 %v770, %v768
        %v883 = vpack.c.b16 %v773, %v771
        %v884 = vpack.c.b16 %v774, %v772
        %v885 = vpack.c.b16 %v777, %v775
        %v886 = vpack.c.b16 %v778, %v776
        %v887 = vpack.c.b16 %v781, %v779
        %v888 = vpack.c.b16 %v782, %v780
        %v889 = vpack.c.b16 %v785, %v783
        %v890 = vpack.c.b16 %v786, %v784
        %v891 = vpack.c.b16 %v789, %v787
        %v892 = vpack.c.b16 %v790, %v788
        %v893 = vpack.c.b16 %v793, %v791
        %v894 = vpack.c.b16 %v794, %v792
        %v895 = vpack.c.b16 %v797, %v795
        %v896 = vpack.c.b16 %v798, %v796
        %v897 = vpack.c.b16 %v801, %v799
        %v898 = vpack.c.b16 %v802, %v800
        %v899 = vpack.c.b16 %v805, %v803
        %v900 = vpack.c.b16 %v806, %v804
        %v901 = vpack.c.b16 %v809, %v807
        %v902 = vpack.c.b16 %v810, %v808
        %v903 = vpack.c.b16 %v813, %v811
        %v904 = vpack.c.b16 %v814, %v812
        %v905 = vpack.c.b16 %v817, %v815
        %v906 = vpack.c.b16 %v818, %v816
        %v907 = vpack.c.b16 %v821, %v819
        %v908 = vpack.c.b16 %v822, %v820
        %v909 = vpack.c.b16 %v825, %v823
        %v910 = vpack.c.b16 %v826, %v824
        %v911 = vpack.c.b16 %v829, %v827
        %v912 = vpack.c.b16 %v830, %v828
        %v913 = vpack.c.b16 %v833, %v831
        %v914 = vpack.c.b16 %v834, %v832
        %v915 = vpack.c.b16 %v837, %v835
        %v916 = vpack.c.b16 %v838, %v836
        %v917 = vpack.c.b16 %v841, %v839
        %v918 = vpack.c.b16 %v842, %v840
        %v919 = vpack.c.b16 %v845, %v843
        %v920 = vpack.c.b16 %v846, %v844
        %v921 = vpack.c.b16 %v849, %v847
        %v922 = vpack.c.b16 %v850, %v848
        %v923 = vpack.c.b16 %v853, %v851
        %v924 = vpack.c.b16 %v854, %v852
        %v925 = vpack.c.b16 %v857, %v855
        %v926 = vpack.c.b16 %v858, %v856
        %v927 = vpack.c.b16 %v861, %v859
        %v928 = vpack.c.b16 %v862, %v860
        %v929 = vpack.c.b16 %v865, %v863
        %v930 = vpack.c.b16 %v866, %v864
        %995 = vmatprep.subr.bf16.mxu0 %v868
        %996 = vmatpush1.bf16.msra.mxu0 %v867
        %997 = vmatprep.subr.bf16.mxu0 %v870
        %998 = vmatpush1.bf16.msra.mxu0 %v869
        %999 = vmatprep.subr.bf16.mxu0 %v872
        %1000 = vmatpush1.bf16.msra.mxu0 %v871
        %1001 = vmatprep.subr.bf16.mxu0 %v874
        %1002 = vmatpush1.bf16.msra.mxu0 %v873
        %1003 = vmatprep.subr.bf16.mxu0 %v876
        %1004 = vmatpush1.bf16.msra.mxu0 %v875
        %1005 = vmatprep.subr.bf16.mxu0 %v878
        %1006 = vmatpush1.bf16.msra.mxu0 %v877
        %1007 = vmatprep.subr.bf16.mxu0 %v880
        %1008 = vmatpush1.bf16.msra.mxu0 %v879
        %1009 = vmatprep.subr.bf16.mxu0 %v882
        %1010 = vmatpush1.bf16.msra.mxu0 %v881
        %1011 = vmatprep.subr.bf16.mxu0 %v884
        %1012 = vmatpush1.bf16.msra.mxu0 %v883
        %1013 = vmatprep.subr.bf16.mxu0 %v886
        %1014 = vmatpush1.bf16.msra.mxu0 %v885
        %1015 = vmatprep.subr.bf16.mxu0 %v888
        %1016 = vmatpush1.bf16.msra.mxu0 %v887
        %1017 = vmatprep.subr.bf16.mxu0 %v890
        %1018 = vmatpush1.bf16.msra.mxu0 %v889
        %1019 = vmatprep.subr.bf16.mxu0 %v892
        %1020 = vmatpush1.bf16.msra.mxu0 %v891
        %1021 = vmatprep.subr.bf16.mxu0 %v894
        %1022 = vmatpush1.bf16.msra.mxu0 %v893
        %1023 = vmatprep.subr.bf16.mxu0 %v896
        %1024 = vmatpush1.bf16.msra.mxu0 %v895
        %1025 = vmatprep.subr.bf16.mxu0 %v898
        %1026 = vmatpush1.bf16.msra.mxu0 %v897
        %1027 = vmatprep.mubr.bf16.mxu0 %v596
        %1028 = vmatmul.mubr.bf16.gmra.mrb[0].mxu0 %v595
        %v1029 = vpop.f32.mrb[0].mxu0
        %v1030 = vadd.f32 %v668, %v1029
        %v1031 = vpop.f32.mrb[0].mxu0
        %v1032 = vadd.f32 %v672, %v1031
        %v1033 = vpop.f32.mrb[0].mxu0
        %v1034 = vpop.f32.mrb[0].mxu0
        %1035 = vdwg.mxu0
        %1036 = vmatprep.subr.bf16.mxu0 %v900
        %1037 = vmatpush1.bf16.msra.mxu0 %v899
        %1038 = vmatprep.subr.bf16.mxu0 %v902
        %1039 = vmatpush1.bf16.msra.mxu0 %v901
        %1040 = vmatprep.subr.bf16.mxu0 %v904
        %1041 = vmatpush1.bf16.msra.mxu0 %v903
        %1042 = vmatprep.subr.bf16.mxu0 %v906
        %1043 = vmatpush1.bf16.msra.mxu0 %v905
        %1044 = vmatprep.subr.bf16.mxu0 %v908
        %1045 = vmatpush1.bf16.msra.mxu0 %v907
        %1046 = vmatprep.subr.bf16.mxu0 %v910
        %1047 = vmatpush1.bf16.msra.mxu0 %v909
        %1048 = vmatprep.subr.bf16.mxu0 %v912
        %1049 = vmatpush1.bf16.msra.mxu0 %v911
        %1050 = vmatprep.subr.bf16.mxu0 %v914
        %1051 = vmatpush1.bf16.msra.mxu0 %v913
        %1052 = vmatprep.subr.bf16.mxu0 %v916
        %1053 = vmatpush1.bf16.msra.mxu0 %v915
        %1054 = vmatprep.subr.bf16.mxu0 %v918
        %1055 = vmatpush1.bf16.msra.mxu0 %v917
        %1056 = vmatprep.subr.bf16.mxu0 %v920
        %1057 = vmatpush1.bf16.msra.mxu0 %v919
        %1058 = vmatprep.subr.bf16.mxu0 %v922
        %1059 = vmatpush1.bf16.msra.mxu0 %v921
        %1060 = vmatprep.subr.bf16.mxu0 %v924
        %1061 = vmatpush1.bf16.msra.mxu0 %v923
        %1062 = vmatprep.subr.bf16.mxu0 %v926
        %1063 = vmatpush1.bf16.msra.mxu0 %v925
        %1064 = vmatprep.subr.bf16.mxu0 %v928
        %1065 = vmatpush1.bf16.msra.mxu0 %v927
        %1066 = vmatprep.subr.bf16.mxu0 %v930
        %1067 = vmatpush1.bf16.msra.mxu0 %v929
        %1068 = vmatprep.mubr.bf16.mxu0 %v598
        %1069 = vmatmul.mubr.bf16.gmra.mrb[0].mxu0 %v597
        %v1070 = vpop.f32.mrb[0].mxu0
        %v1071 = vadd.f32 %v1030, %v1070
        %v1072 = vpop.f32.mrb[0].mxu0
        %v1073 = vadd.f32 %v1032, %v1072
        %v1074 = vpop.f32.mrb[0].mxu0
        %v1075 = vpop.f32.mrb[0].mxu0
        %1076 = vdwg.mxu0
        %v1077 = vpack.c.bf16 %v1071, %v1071
        %v1078 = vpack.c.bf16 %v1073, %v1073
        %vm1079 = vcmp.gt.bf16.partialorder %v1077, 0
        %vm1080 = vcmp.gt.bf16.partialorder %v1078, 0
        %v1082 = vmul.bf16 %v1077, 1069105081
        %v1083 = vpow.bf16.pop %v1082
        %v1085 = vmul.bf16 %v1078, 1069105081
        %v1086 = vpow.bf16.pop %v1085
        %v1087 = vsub.bf16 %v1083, 1065369472
        %v1088 = vsub.bf16 %v1086, 1065369472
        %v1089 = vsel %vm1079, %v1077, %v1087
        %v1090 = vsel %vm1080, %v1078, %v1088
        %v1091 = vld [vmem:[#allocation6] sm:$0xf]
        %v1092 = vld [vmem:[#allocation6 + $0x4] sm:$0xf]
        %v1093 = vld [vmem:[#allocation6 + $0x8] sm:$0xf]
        %v1094 = vld [vmem:[#allocation6 + $0xc] sm:$0xf]
        %v1095 = vld [vmem:[#allocation6 + $0x10] sm:$0xf]
        %v1096 = vld [vmem:[#allocation6 + $0x14] sm:$0xf]
        %v1097 = vld [vmem:[#allocation6 + $0x18] sm:$0xf]
        %v1098 = vld [vmem:[#allocation6 + $0x1c] sm:$0xf]
        %v1099 = vld [vmem:[#allocation6 + $0x20] sm:$0xf]
        %v1100 = vld [vmem:[#allocation6 + $0x24] sm:$0xf]
        %v1101 = vld [vmem:[#allocation6 + $0x28] sm:$0xf]
        %v1102 = vld [vmem:[#allocation6 + $0x2c] sm:$0xf]
        %v1103 = vld [vmem:[#allocation6 + $0x30] sm:$0xf]
        %v1104 = vld [vmem:[#allocation6 + $0x34] sm:$0xf]
        %v1105 = vld [vmem:[#allocation6 + $0x38] sm:$0xf]
        %v1106 = vld [vmem:[#allocation6 + $0x3c] sm:$0xf]
        %v1107 = vld [vmem:[#allocation6 + $0x40] sm:$0xf]
        %v1108 = vld [vmem:[#allocation6 + $0x44] sm:$0xf]
        %v1109 = vld [vmem:[#allocation6 + $0x48] sm:$0xf]
        %v1110 = vld [vmem:[#allocation6 + $0x4c] sm:$0xf]
        %v1111 = vld [vmem:[#allocation6 + $0x50] sm:$0xf]
        %v1112 = vld [vmem:[#allocation6 + $0x54] sm:$0xf]
        %v1113 = vld [vmem:[#allocation6 + $0x58] sm:$0xf]
        %v1114 = vld [vmem:[#allocation6 + $0x5c] sm:$0xf]
        %v1115 = vld [vmem:[#allocation6 + $0x60] sm:$0xf]
        %v1116 = vld [vmem:[#allocation6 + $0x64] sm:$0xf]
        %v1117 = vld [vmem:[#allocation6 + $0x68] sm:$0xf]
        %v1118 = vld [vmem:[#allocation6 + $0x6c] sm:$0xf]
        %v1119 = vld [vmem:[#allocation6 + $0x70] sm:$0xf]
        %v1120 = vld [vmem:[#allocation6 + $0x74] sm:$0xf]
        %v1121 = vld [vmem:[#allocation6 + $0x78] sm:$0xf]
        %v1122 = vld [vmem:[#allocation6 + $0x7c] sm:$0xf]
        %v1123 = vld [vmem:[%s6] sm:$0x1]
        %v1125 = vlaneseq
        %v1126 = vshrl.u32 %v1125, 7
        %v1127 = vsub.s32 0, %v1126
        %v1128 = vrot.slane %v1123, %v1127
        %v1162 = vunpack.c.l.b16 %v1091
        %v1163 = vunpack.c.l.b16 %v1092
        %v1164 = vunpack.c.l.b16 %v1093
        %v1165 = vunpack.c.l.b16 %v1094
        %v1166 = vunpack.c.l.b16 %v1095
        %v1167 = vunpack.c.l.b16 %v1096
        %v1168 = vunpack.c.l.b16 %v1097
        %v1169 = vunpack.c.l.b16 %v1098
        %v1170 = vunpack.c.l.b16 %v1099
        %v1171 = vunpack.c.l.b16 %v1100
        %v1172 = vunpack.c.l.b16 %v1101
        %v1173 = vunpack.c.l.b16 %v1102
        %v1174 = vunpack.c.l.b16 %v1103
        %v1175 = vunpack.c.l.b16 %v1104
        %v1176 = vunpack.c.l.b16 %v1105
        %v1177 = vunpack.c.l.b16 %v1106
        %v1178 = vunpack.c.l.b16 %v1107
        %v1179 = vunpack.c.l.b16 %v1108
        %v1180 = vunpack.c.l.b16 %v1109
        %v1181 = vunpack.c.l.b16 %v1110
        %v1182 = vunpack.c.l.b16 %v1111
        %v1183 = vunpack.c.l.b16 %v1112
        %v1184 = vunpack.c.l.b16 %v1113
        %v1185 = vunpack.c.l.b16 %v1114
        %v1186 = vunpack.c.l.b16 %v1115
        %v1187 = vunpack.c.l.b16 %v1116
        %v1188 = vunpack.c.l.b16 %v1117
        %v1189 = vunpack.c.l.b16 %v1118
        %v1190 = vunpack.c.l.b16 %v1119
        %v1191 = vunpack.c.l.b16 %v1120
        %v1192 = vunpack.c.l.b16 %v1121
        %v1193 = vunpack.c.l.b16 %v1122
        %v1194 = vpack.c.b16 %v1163, %v1162
        %v1195 = vpack.c.b16 %v1165, %v1164
        %v1196 = vpack.c.b16 %v1167, %v1166
        %v1197 = vpack.c.b16 %v1169, %v1168
        %v1198 = vpack.c.b16 %v1171, %v1170
        %v1199 = vpack.c.b16 %v1173, %v1172
        %v1200 = vpack.c.b16 %v1175, %v1174
        %v1201 = vpack.c.b16 %v1177, %v1176
        %v1202 = vpack.c.b16 %v1179, %v1178
        %v1203 = vpack.c.b16 %v1181, %v1180
        %v1204 = vpack.c.b16 %v1183, %v1182
        %v1205 = vpack.c.b16 %v1185, %v1184
        %v1206 = vpack.c.b16 %v1187, %v1186
        %v1207 = vpack.c.b16 %v1189, %v1188
        %v1208 = vpack.c.b16 %v1191, %v1190
        %v1209 = vpack.c.b16 %v1193, %v1192
        %1226 = vmatprep.subr.bf16.mxu0 0
        %1227 = vmatpush1.bf16.msra.mxu0 %v1194
        %1228 = vmatprep.subr.bf16.mxu0 0
        %1229 = vmatpush1.bf16.msra.mxu0 %v1195
        %1230 = vmatprep.subr.bf16.mxu0 0
        %1231 = vmatpush1.bf16.msra.mxu0 %v1196
        %1232 = vmatprep.subr.bf16.mxu0 0
        %1233 = vmatpush1.bf16.msra.mxu0 %v1197
        %1234 = vmatprep.subr.bf16.mxu0 0
        %1235 = vmatpush1.bf16.msra.mxu0 %v1198
        %1236 = vmatprep.subr.bf16.mxu0 0
        %1237 = vmatpush1.bf16.msra.mxu0 %v1199
        %1238 = vmatprep.subr.bf16.mxu0 0
        %1239 = vmatpush1.bf16.msra.mxu0 %v1200
        %1240 = vmatprep.subr.bf16.mxu0 0
        %1241 = vmatpush1.bf16.msra.mxu0 %v1201
        %1242 = vmatprep.subr.bf16.mxu0 0
        %1243 = vmatpush1.bf16.msra.mxu0 %v1202
        %1244 = vmatprep.subr.bf16.mxu0 0
        %1245 = vmatpush1.bf16.msra.mxu0 %v1203
        %1246 = vmatprep.subr.bf16.mxu0 0
        %1247 = vmatpush1.bf16.msra.mxu0 %v1204
        %1248 = vmatprep.subr.bf16.mxu0 0
        %1249 = vmatpush1.bf16.msra.mxu0 %v1205
        %1250 = vmatprep.subr.bf16.mxu0 0
        %1251 = vmatpush1.bf16.msra.mxu0 %v1206
        %1252 = vmatprep.subr.bf16.mxu0 0
        %1253 = vmatpush1.bf16.msra.mxu0 %v1207
        %1254 = vmatprep.subr.bf16.mxu0 0
        %1255 = vmatpush1.bf16.msra.mxu0 %v1208
        %1256 = vmatprep.subr.bf16.mxu0 0
        %1257 = vmatpush1.bf16.msra.mxu0 %v1209
        %1258 = vmatprep.mubr.bf16.mxu0 %v1090
        %1259 = vmatmul.mubr.bf16.gmra.mrb[0].mxu0 %v1089
        %v1260 = vpop.f32.mrb[0].mxu0
        %v1261 = vadd.f32 %v1128, %v1260
        %v1262 = vpop.f32.mrb[0].mxu0
        %v1263 = vpop.f32.mrb[0].mxu0
        %v1264 = vpop.f32.mrb[0].mxu0
        %1265 = vdwg.mxu0
        %v1266 = vpack.c.bf16 %v1261, %v1261
        %vm1267 = vcmp.gt.bf16.partialorder %v1266, 0
        %v1269 = vmul.bf16 %v1266, 1069105081
        %v1270 = vpow.bf16.pop %v1269
        %v1271 = vsub.bf16 %v1270, 1065369472
        %v1272 = vsel %vm1267, %v1266, %v1271
        %v1273 = vld [vmem:[#allocation7] sm:$0xf]
        %v1274 = vld [vmem:[#allocation7 + $0x4] sm:$0xf]
        %v1275 = vld [vmem:[#allocation7 + $0x8] sm:$0xf]
        %v1276 = vld [vmem:[#allocation7 + $0xc] sm:$0xf]
        %v1277 = vld [vmem:[#allocation7 + $0x10] sm:$0xf]
        %v1278 = vld [vmem:[#allocation7 + $0x14] sm:$0xf]
        %v1279 = vld [vmem:[#allocation7 + $0x18] sm:$0xf]
        %v1280 = vld [vmem:[#allocation7 + $0x1c] sm:$0xf]
        %v1281 = vld [vmem:[#allocation7 + $0x20] sm:$0xf]
        %v1282 = vld [vmem:[#allocation7 + $0x24] sm:$0xf]
        %v1283 = vld [vmem:[#allocation7 + $0x28] sm:$0xf]
        %v1284 = vld [vmem:[#allocation7 + $0x2c] sm:$0xf]
        %v1285 = vld [vmem:[#allocation7 + $0x30] sm:$0xf]
        %v1286 = vld [vmem:[#allocation7 + $0x34] sm:$0xf]
        %v1287 = vld [vmem:[#allocation7 + $0x38] sm:$0xf]
        %v1288 = vld [vmem:[#allocation7 + $0x3c] sm:$0xf]
        %v1289 = vld [vmem:[%s8] sm:$0x1]
        %v1291 = vlaneseq
        %v1292 = vshrl.u32 %v1291, 7
        %v1293 = vsub.s32 0, %v1292
        %v1294 = vrot.slane %v1289, %v1293
        %v1312 = vunpack.c.l.b16 %v1273
        %v1313 = vunpack.c.l.b16 %v1274
        %v1314 = vunpack.c.l.b16 %v1275
        %v1315 = vunpack.c.l.b16 %v1276
        %v1316 = vunpack.c.l.b16 %v1277
        %v1317 = vunpack.c.l.b16 %v1278
        %v1318 = vunpack.c.l.b16 %v1279
        %v1319 = vunpack.c.l.b16 %v1280
        %v1320 = vunpack.c.l.b16 %v1281
        %v1321 = vunpack.c.l.b16 %v1282
        %v1322 = vunpack.c.l.b16 %v1283
        %v1323 = vunpack.c.l.b16 %v1284
        %v1324 = vunpack.c.l.b16 %v1285
        %v1325 = vunpack.c.l.b16 %v1286
        %v1326 = vunpack.c.l.b16 %v1287
        %v1327 = vunpack.c.l.b16 %v1288
        %v1328 = vpack.c.b16 %v1313, %v1312
        %v1329 = vpack.c.b16 %v1315, %v1314
        %v1330 = vpack.c.b16 %v1317, %v1316
        %v1331 = vpack.c.b16 %v1319, %v1318
        %v1332 = vpack.c.b16 %v1321, %v1320
        %v1333 = vpack.c.b16 %v1323, %v1322
        %v1334 = vpack.c.b16 %v1325, %v1324
        %v1335 = vpack.c.b16 %v1327, %v1326
        %1344 = vmatprep.subr.bf16.mxu0 0
        %1345 = vmatpush1.bf16.msra.mxu0 %v1328
        %1346 = vmatprep.subr.bf16.mxu0 0
        %1347 = vmatpush1.bf16.msra.mxu0 %v1329
        %1348 = vmatprep.subr.bf16.mxu0 0
        %1349 = vmatpush1.bf16.msra.mxu0 %v1330
        %1350 = vmatprep.subr.bf16.mxu0 0
        %1351 = vmatpush1.bf16.msra.mxu0 %v1331
        %1352 = vmatprep.subr.bf16.mxu0 0
        %1353 = vmatpush1.bf16.msra.mxu0 %v1332
        %1354 = vmatprep.subr.bf16.mxu0 0
        %1355 = vmatpush1.bf16.msra.mxu0 %v1333
        %1356 = vmatprep.subr.bf16.mxu0 0
        %1357 = vmatpush1.bf16.msra.mxu0 %v1334
        %1358 = vmatprep.subr.bf16.mxu0 0
        %1359 = vmatpush1.bf16.msra.mxu0 %v1335
        %1360 = vmatprep.subr.bf16.mxu0 0
        %1361 = vmatpush1.bf16.msra.mxu0 0
        %1362 = vmatprep.subr.bf16.mxu0 0
        %1363 = vmatpush1.bf16.msra.mxu0 0
        %1364 = vmatprep.subr.bf16.mxu0 0
        %1365 = vmatpush1.bf16.msra.mxu0 0
        %1366 = vmatprep.subr.bf16.mxu0 0
        %1367 = vmatpush1.bf16.msra.mxu0 0
        %1368 = vmatprep.subr.bf16.mxu0 0
        %1369 = vmatpush1.bf16.msra.mxu0 0
        %1370 = vmatprep.subr.bf16.mxu0 0
        %1371 = vmatpush1.bf16.msra.mxu0 0
        %1372 = vmatprep.subr.bf16.mxu0 0
        %1373 = vmatpush1.bf16.msra.mxu0 0
        %1374 = vmatprep.subr.bf16.mxu0 0
        %1375 = vmatpush1.bf16.msra.mxu0 0
        %1376 = vmatprep.mubr.bf16.mxu0 0
        %1377 = vmatmul.mubr.bf16.gmra.mrb[0].mxu0 %v1272
        %v1378 = vpop.f32.mrb[0].mxu0
        %v1379 = vadd.f32 %v1294, %v1378
        %v1380 = vpop.f32.mrb[0].mxu0
        %v1381 = vpop.f32.mrb[0].mxu0
        %v1382 = vpop.f32.mrb[0].mxu0
        %1383 = vdwg.mxu0
        %vm1384 = vcmask 97280
        %1385 = vst.msk [vmem:[%s386] sm:$0xff] %vm1384, %v1379
        %p1386 = scmp.lt.s32.totalorder %s23, 1
        %s1387 = scalar_select %p1386, %s23, 1
        %s1388 = smul.addr %s1387, 8
        %s1389 = scalar_lea.vmem %s9, %s1388
        // Predicated region
        $region73: #{agent_forward.1} parent=55 // pred_check
          %p1390 = pneg %p235
        $region74: #{agent_forward.1} parent=55 // pred_check_branch
          %1392 = sbr.rel (%p1390) target = $region76
        $region75: #{agent_forward.1} parent=55 // pred_region
          _
        $region76: #{agent_forward.1} parent=55 // pred_fallthru
          _
      $region56: #{agent_forward.1} parent=5 // pred_fallthru
        _
      %p1393 = scmp.le.s32.totalorder 2, %s18
      // Predicated region
      $region77: #{agent_forward.1} parent=5 // pred_check
        %p1394 = pneg %p1393
      $region78: #{agent_forward.1} parent=5 // pred_check_branch
        %1396 = sbr.rel (%p1394) target = $region80
      $region79: #{agent_forward.1} parent=5 // pred_region
        %s1397 = ssub.s32 %s18, 2
        // Predicated region
        $region81: #{agent_forward.1} parent=79 // pred_check
          %p1398 = pneg %p241
        $region82: #{agent_forward.1} parent=79 // pred_check_branch
          %1400 = sbr.rel (%p1398) target = $region84
        $region83: #{agent_forward.1} parent=79 // pred_region
          %p1401 = scmp.lt.s32.totalorder %s24, 1
          %s1402 = scalar_select %p1401, %s24, 1
          %s1403 = smul.addr %s1402, 8
          %s1404 = scalar_lea.vmem %s9, %s1403
        $region84: #{agent_forward.1} parent=79 // pred_fallthru
          _
      $region80: #{agent_forward.1} parent=5 // pred_fallthru
        _
    $region6: #{agent_forward.1} parent=1 // loop_footer
      %s22 = sadd.s32 1, %s18
    $region7: #{agent_forward.1} parent=1 // loop_footer_branch
      %17 = sbr.rel target = $region3
    $region8: #{agent_forward.1} parent=1 // loop_exit
      _
    %1405 = vsyncpa [#allocation3], 1
    %s1406 = scalar_lea.sflag [#allocation3], 1
    %1407 = vsyncpa %s1406, 1
    %1408 = vsyncpa [#allocation5], 1
    %1409 = vsyncpa [#allocation8], 1

</llo_original>
